<compile_context>
chip_gen: v6e
topology: v6e:2x2x1
jax: 0.10.0
libtpu: 0.0.40
codegen_flags: <defaults>
</compile_context>

<pallas_src>
import functools

import jax
import jax.numpy as jnp
from jax import lax
from jax.experimental import pallas as pl
from jax.experimental.pallas import tpu as pltpu


def _round_up(n, m):
    return ((n + m - 1) // m) * m


def lstm_kernel(gx_ref, whh_ref, wlin_ref, blin_ref, o_ref, h_sc, c_sc, *,
                seq_len, unroll):
    """One T-chunk of the LSTM recurrence (+ Linear head on the last chunk).

    gx_ref   : (Tt, Bp, 4*Hp) VMEM bf16 -- precomputed x_t @ W_ih + (b_ih+b_hh)
    whh_ref  : (Hp, 4*Hp)     VMEM bf16 -- recurrent weights, gate-padded layout
    wlin_ref : (Hp, Doutp)    VMEM f32  -- head weights (rows >= H / cols >= Dout zero)
    blin_ref : (1, Doutp)     VMEM f32  -- head bias (cols >= Dout zero)
    o_ref    : (Bp, Doutp)    VMEM f32  -- written on the last chunk only
    h_sc,c_sc: (Bp, Hp)       VMEM f32  -- persistent hidden/cell state across chunks
    """
    t_chunk = pl.program_id(0)
    Tt = gx_ref.shape[0]
    Hp = whh_ref.shape[0]

    @pl.when(t_chunk == 0)
    def _():
        h_sc[...] = jnp.zeros_like(h_sc)
        c_sc[...] = jnp.zeros_like(c_sc)

    whh = whh_ref[...]            # loop-invariant bf16 RHS, loaded once per chunk
    base = t_chunk * Tt           # global index of this chunk's first timestep

    def step(i, carry):
        h, c = carry              # f32 (Bp, Hp)
        # Only the recurrent matmul sits on the serial critical path; bf16 MXU
        # inputs, f32 accumulation.
        g = (gx_ref[i].astype(jnp.float32)
             + jnp.dot(h.astype(whh.dtype), whh,
                       preferred_element_type=jnp.float32))
        # PyTorch gate order i, f, g, o; each gate slab starts at a multiple of
        # 128 lanes so the slices are free full-vreg views.  Elementwise in f32.
        i_g = jax.nn.sigmoid(g[:, 0 * Hp:1 * Hp])
        f_g = jax.nn.sigmoid(g[:, 1 * Hp:2 * Hp])
        g_g = jnp.tanh(g[:, 2 * Hp:3 * Hp])
        o_g = jax.nn.sigmoid(g[:, 3 * Hp:4 * Hp])
        c_new = f_g * c + i_g * g_g
        h_new = o_g * jnp.tanh(c_new)
        # Mask the zero-padded tail timesteps of the last chunk (padding is NOT
        # an LSTM identity: sigmoid(0) = 0.5 would mutate the state).
        valid = (base + i) < seq_len
        h = jnp.where(valid, h_new, h)
        c = jnp.where(valid, c_new, c)
        return h, c

    h, c = lax.fori_loop(0, Tt, step, (h_sc[...], c_sc[...]), unroll=unroll)
    h_sc[...] = h                 # single store per chunk, not per step
    c_sc[...] = c

    @pl.when(t_chunk == pl.num_programs(0) - 1)
    def _():
        o_ref[...] = (jnp.dot(h, wlin_ref[...],
                              preferred_element_type=jnp.float32)
                      + blin_ref[...])


def init_params(key, in_dim=12, hidden_dim=10, output_dim=12):
    """Deterministic PyTorch-style init: U(-1/sqrt(H), 1/sqrt(H))."""
    k = 1.0 / jnp.sqrt(jnp.float32(hidden_dim))
    ks = jax.random.split(key, 6)
    u = lambda kk, shape: jax.random.uniform(kk, shape, jnp.float32, -k, k)
    return {
        "w_ih": u(ks[0], (4 * hidden_dim, in_dim)),
        "w_hh": u(ks[1], (4 * hidden_dim, hidden_dim)),
        "b_ih": u(ks[2], (4 * hidden_dim,)),
        "b_hh": u(ks[3], (4 * hidden_dim,)),
        "w_lin": u(ks[4], (output_dim, hidden_dim)),
        "b_lin": u(ks[5], (output_dim,)),
    }


def lstm_forward(x, params, *, max_chunk=128, unroll=8,
                 gates_dtype=jnp.bfloat16, matmul_dtype=jnp.bfloat16,
                 vmem_budget_bytes=24 << 20):
    """x: (B, T, in_dim) batch_first, float32. Returns (B, output_dim)."""
    B, T, Din = x.shape
    H = params["w_hh"].shape[1]
    Dout = params["w_lin"].shape[0]
    Hp = _round_up(H, 128)            # lane-aligned per-gate width
    Bp = _round_up(max(B, 8), 8)      # sublane-aligned batch
    Doutp = _round_up(Dout, 128)      # lane-dense output slab

    x = x.astype(jnp.float32)

    # --- Re-lay out weights: gates stacked along a lane-aligned 4*Hp axis. ---
    def gate_pad_cols(w):             # (4H, K) -> (K, 4*Hp), zero-padded
        K = w.shape[1]
        w4 = w.reshape(4, H, K)
        w4p = jnp.zeros((4, Hp, K), jnp.float32).at[:, :H, :].set(w4)
        return w4p.reshape(4 * Hp, K).T

    wih_p = gate_pad_cols(params["w_ih"])                           # (Din, 4Hp)
    whh_p = jnp.zeros((Hp, 4 * Hp), jnp.float32).at[:H, :].set(
        gate_pad_cols(params["w_hh"])).astype(matmul_dtype)         # (Hp, 4Hp) bf16
    b4 = (params["b_ih"] + params["b_hh"]).reshape(4, H)
    b_p = jnp.zeros((4, Hp), jnp.float32).at[:, :H].set(b4).reshape(1, 4 * Hp)
    wlin_p = jnp.zeros((Hp, Doutp), jnp.float32).at[:H, :Dout].set(
        params["w_lin"].T)                                          # (Hp, Doutp)
    blin = jnp.zeros((1, Doutp), jnp.float32).at[0, :Dout].set(params["b_lin"])

    # --- Input projection for ALL timesteps as one big MXU matmul, hoisted out
    # of the serial recurrence (also folds batch_first -> time-major transpose
    # and the summed bias). ---
    gates = jnp.einsum("btd,dg->tbg", x, wih_p,
                       preferred_element_type=jnp.float32) + b_p     # (T, B, 4Hp)

    # --- VMEM-budget-driven T-chunking (cdiv + masked tail). ---
    gbytes = jnp.dtype(gates_dtype).itemsize
    step_bytes = Bp * 4 * Hp * gbytes                       # one timestep of gates
    weight_bytes = 2 * (whh_p.size * whh_p.dtype.itemsize   # double-buffered by
                        + wlin_p.size * 4 + blin.size * 4)  # default pipelining
    state_bytes = 2 * Bp * Hp * 4 + 2 * Bp * Doutp * 4
    gates_budget = max(vmem_budget_bytes - weight_bytes - state_bytes - (2 << 20),
                       2 * step_bytes)
    Tt = int(min(T, max_chunk, max(1, gates_budget // (2 * step_bytes))))
    n_chunks = int(pl.cdiv(T, Tt))
    Tp = n_chunks * Tt

    gates = jnp.pad(gates,
                    ((0, Tp - T), (0, Bp - B), (0, 0))).astype(gates_dtype)

    unroll_eff = max(1, min(int(unroll), Tt))
    while Tt % unroll_eff:            # keep the unroll factor dividing Tt
        unroll_eff -= 1

    vmem_limit = int(min(100 << 20,
                         2 * Tt * step_bytes + weight_bytes + state_bytes
                         + (8 << 20)))

    cost = pl.CostEstimate(
        flops=int(2 * Tp * Bp * Hp * 4 * Hp + 2 * Bp * Hp * Doutp),
        transcendentals=int(5 * Tp * Bp * Hp),
        bytes_accessed=int(Tp * Bp * 4 * Hp * gbytes
                           + whh_p.size * whh_p.dtype.itemsize
                           + wlin_p.size * 4 + blin.size * 4
                           + Bp * Doutp * 4),
    )

    out = pl.pallas_call(
        functools.partial(lstm_kernel, seq_len=T, unroll=unroll_eff),
        out_shape=jax.ShapeDtypeStruct((Bp, Doutp), jnp.float32),
        grid_spec=pltpu.PrefetchScalarGridSpec(
            num_scalar_prefetch=0,
            grid=(n_chunks,),
            in_specs=[
                # Streamed over T-chunks (double-buffered HBM->VMEM DMA).
                pl.BlockSpec((Tt, Bp, 4 * Hp), lambda t: (t, 0, 0)),
                # Weights: constant block index -> fetched once, stay resident.
                # (For H >> 128 add pipeline_mode=pl.Buffered(1) here to halve
                #  resident weight VMEM.)
                pl.BlockSpec((Hp, 4 * Hp), lambda t: (0, 0)),
                pl.BlockSpec((Hp, Doutp), lambda t: (0, 0)),
                pl.BlockSpec((1, Doutp), lambda t: (0, 0)),
            ],
            out_specs=pl.BlockSpec((Bp, Doutp), lambda t: (0, 0)),
            scratch_shapes=[pltpu.VMEM((Bp, Hp), jnp.float32),   # h state
                            pltpu.VMEM((Bp, Hp), jnp.float32)],  # c state
        ),
        compiler_params=pltpu.CompilerParams(
            dimension_semantics=("arbitrary",),   # recurrence is serial in T
            vmem_limit_bytes=vmem_limit),
        cost_estimate=cost,
    )(gates, whh_p, wlin_p, blin)

    return out[:B, :Dout]


def lstm_ref(x, params):
    """Pure-JAX f32 reference (nn.LSTM semantics + Linear on final hidden state)."""
    B, T, Din = x.shape
    H = params["w_hh"].shape[1]
    w_ih, w_hh = params["w_ih"], params["w_hh"]
    b = params["b_ih"] + params["b_hh"]

    def cell(carry, xt):
        h, c = carry
        g = xt @ w_ih.T + h @ w_hh.T + b
        i = jax.nn.sigmoid(g[:, 0:H])
        f = jax.nn.sigmoid(g[:, H:2 * H])
        gg = jnp.tanh(g[:, 2 * H:3 * H])
        o = jax.nn.sigmoid(g[:, 3 * H:4 * H])
        c = f * c + i * gg
        h = o * jnp.tanh(c)
        return (h, c), None

    h0 = jnp.zeros((B, H), jnp.float32)
    (h, _), _ = lax.scan(cell, (h0, h0), jnp.transpose(x, (1, 0, 2)))
    return h @ params["w_lin"].T + params["b_lin"]


if __name__ == "__main__":
    IN_DIM, HIDDEN, OUT_DIM = 12, 10, 12
    B, T = 2, 8

    key = jax.random.PRNGKey(0)
    k_x, k_p = jax.random.split(key)
    x = jax.random.normal(k_x, (B, T, IN_DIM), dtype=jnp.float32)
    params = init_params(k_p, IN_DIM, HIDDEN, OUT_DIM)

    # max_chunk=3 -> 3 grid chunks over T=8 (T padded to 9, tail step masked),
    # exercising streamed recurrence, cdiv chunking + tail mask and bounded unroll.
    out = lstm_forward(x, params, max_chunk=3, unroll=8)
    jax.block_until_ready(out)

    ref = lstm_ref(x, params)
    assert out.shape == (B, OUT_DIM)
    assert jnp.all(jnp.isfinite(out))
    # bf16 MXU inputs / bf16 gate stream (f32 accumulation + f32 elementwise):
    # tolerance loosened vs. the pure-f32 reference per the perf review.
    assert jnp.allclose(out, ref, rtol=2e-2, atol=2e-2), float(jnp.max(jnp.abs(out - ref)))
    print("KERNEL_OK")
</pallas_src>

<mosaic_0001>
module attributes {stable_mosaic.version = 11 : i64} {
  func.func @lstm_kernel(%arg0: i32, %arg1: memref<3x8x512xbf16, #tpu.memory_space<vmem>>, %arg2: memref<128x512xbf16, #tpu.memory_space<vmem>>, %arg3: memref<128x128xf32, #tpu.memory_space<vmem>>, %arg4: memref<1x128xf32, #tpu.memory_space<vmem>>, %arg5: memref<8x128xf32, #tpu.memory_space<vmem>>, %arg6: memref<8x128xf32, #tpu.memory_space<vmem>>, %arg7: memref<8x128xf32, #tpu.memory_space<vmem>>) attributes {dimension_semantics = [#tpu.dimension_semantics<arbitrary>], iteration_bounds = array<i64: 3>, scalar_prefetch = 0 : i64, scratch_operands = 2 : i64, tpu.core_type = #tpu.core_type<tc>, window_params = [{transform_indices = @transform_0, window_bounds = array<i64: 3, 8, 512>}, {pipeline_mode = #tpu.pipeline_mode<synchronous>, transform_indices = @transform_1, window_bounds = array<i64: 128, 512>}, {pipeline_mode = #tpu.pipeline_mode<synchronous>, transform_indices = @transform_2, window_bounds = array<i64: 128, 128>}, {pipeline_mode = #tpu.pipeline_mode<synchronous>, transform_indices = @transform_3, window_bounds = array<i64: 1, 128>}, {pipeline_mode = #tpu.pipeline_mode<synchronous>, transform_indices = @transform_4, window_bounds = array<i64: 8, 128>}]} {
    %c0_i32 = arith.constant 0 : i32
    %0 = arith.cmpi eq, %arg0, %c0_i32 : i32
    %1 = arith.extui %0 : i1 to i32
    %c0_i32_0 = arith.constant 0 : i32
    %2 = arith.cmpi ne, %1, %c0_i32_0 : i32
    scf.if %2 {
      %cst_33 = arith.constant 0.000000e+00 : f32
      %120 = vector.broadcast %cst_33 : f32 to vector<8x128xf32>
      %c0_34 = arith.constant 0 : index
      %c0_35 = arith.constant 0 : index
      %121 = vector.load %arg6[%c0_34, %c0_35] : memref<8x128xf32, #tpu.memory_space<vmem>>, vector<8x128xf32>
      tpu.vector_store %arg6[%c0_34, %c0_35], %120 {strides = array<i32>} : memref<8x128xf32, #tpu.memory_space<vmem>>, vector<8x128xf32>,
      %cst_36 = arith.constant 0.000000e+00 : f32
      %122 = vector.broadcast %cst_36 : f32 to vector<8x128xf32>
      %c0_37 = arith.constant 0 : index
      %c0_38 = arith.constant 0 : index
      %123 = vector.load %arg7[%c0_37, %c0_38] : memref<8x128xf32, #tpu.memory_space<vmem>>, vector<8x128xf32>
      tpu.vector_store %arg7[%c0_37, %c0_38], %122 {strides = array<i32>} : memref<8x128xf32, #tpu.memory_space<vmem>>, vector<8x128xf32>,
    } else {
    }
    %c0 = arith.constant 0 : index
    %c0_1 = arith.constant 0 : index
    %3 = vector.load %arg2[%c0, %c0_1] : memref<128x512xbf16, #tpu.memory_space<vmem>>, vector<128x512xbf16>
    %c3_i32 = arith.constant 3 : i32
    %4 = arith.muli %arg0, %c3_i32 : i32
    %c0_2 = arith.constant 0 : index
    %c0_3 = arith.constant 0 : index
    %5 = vector.load %arg6[%c0_2, %c0_3] : memref<8x128xf32, #tpu.memory_space<vmem>>, vector<8x128xf32>
    %c0_4 = arith.constant 0 : index
    %c0_5 = arith.constant 0 : index
    %6 = vector.load %arg7[%c0_4, %c0_5] : memref<8x128xf32, #tpu.memory_space<vmem>>, vector<8x128xf32>
    %c0_i32_6 = arith.constant 0 : i32
    %7 = arith.index_cast %c0_i32_6 : i32 to index
    %c0_7 = arith.constant 0 : index
    %c0_8 = arith.constant 0 : index
    %8 = vector.load %arg1[%7, %c0_7, %c0_8] : memref<3x8x512xbf16, #tpu.memory_space<vmem>>, vector<1x8x512xbf16>
    %9 = vector.shape_cast %8 : vector<1x8x512xbf16> to vector<8x512xbf16>
    %10 = arith.extf %9 : vector<8x512xbf16> to vector<8x512xf32>
    %11 = arith.truncf %5 : vector<8x128xf32> to vector<8x128xbf16>
    %cst = arith.constant dense<0.000000e+00> : vector<8x512xf32>
    %12 = tpu.matmul %11, %3, %cst {dimension_numbers = #tpu.dot_dimension_numbers<[1], [0], [0], [1], [0, 0, 1, 1], [], []>} : vector<8x128xbf16>, vector<128x512xbf16>, vector<8x512xf32> -> vector<8x512xf32>
    %13 = arith.addf %10, %12 : vector<8x512xf32>
    %14 = vector.extract_strided_slice %13 {offsets = [0, 0], sizes = [8, 128], strides = [1, 1]} : vector<8x512xf32> to vector<8x128xf32>
    %15 = arith.negf %14 : vector<8x128xf32>
    %16 = math.exp %15 : vector<8x128xf32>
    %cst_9 = arith.constant 1.000000e+00 : f32
    %17 = vector.broadcast %cst_9 : f32 to vector<8x128xf32>
    %18 = arith.addf %17, %16 : vector<8x128xf32>
    %19 = arith.divf %17, %18 : vector<8x128xf32>
    %20 = vector.extract_strided_slice %13 {offsets = [0, 128], sizes = [8, 128], strides = [1, 1]} : vector<8x512xf32> to vector<8x128xf32>
    %21 = arith.negf %20 : vector<8x128xf32>
    %22 = math.exp %21 : vector<8x128xf32>
    %cst_10 = arith.constant 1.000000e+00 : f32
    %23 = vector.broadcast %cst_10 : f32 to vector<8x128xf32>
    %24 = arith.addf %23, %22 : vector<8x128xf32>
    %25 = arith.divf %23, %24 : vector<8x128xf32>
    %26 = vector.extract_strided_slice %13 {offsets = [0, 256], sizes = [8, 128], strides = [1, 1]} : vector<8x512xf32> to vector<8x128xf32>
    %27 = math.tanh %26 : vector<8x128xf32>
    %28 = vector.extract_strided_slice %13 {offsets = [0, 384], sizes = [8, 128], strides = [1, 1]} : vector<8x512xf32> to vector<8x128xf32>
    %29 = arith.negf %28 : vector<8x128xf32>
    %30 = math.exp %29 : vector<8x128xf32>
    %cst_11 = arith.constant 1.000000e+00 : f32
    %31 = vector.broadcast %cst_11 : f32 to vector<8x128xf32>
    %32 = arith.addf %31, %30 : vector<8x128xf32>
    %33 = arith.divf %31, %32 : vector<8x128xf32>
    %34 = arith.mulf %25, %6 : vector<8x128xf32>
    %35 = arith.mulf %19, %27 : vector<8x128xf32>
    %36 = arith.addf %34, %35 : vector<8x128xf32>
    %37 = math.tanh %36 : vector<8x128xf32>
    %38 = arith.mulf %33, %37 : vector<8x128xf32>
    %39 = arith.addi %4, %c0_i32_6 : i32
    %c8_i32 = arith.constant 8 : i32
    %40 = arith.cmpi slt, %39, %c8_i32 : i32
    %41 = arith.select %40, %38, %5 : vector<8x128xf32>
    %42 = arith.select %40, %36, %6 : vector<8x128xf32>
    %c1_i32 = arith.constant 1 : i32
    %43 = arith.index_cast %c1_i32 : i32 to index
    %c0_12 = arith.constant 0 : index
    %c0_13 = arith.constant 0 : index
    %44 = vector.load %arg1[%43, %c0_12, %c0_13] : memref<3x8x512xbf16, #tpu.memory_space<vmem>>, vector<1x8x512xbf16>
    %45 = vector.shape_cast %44 : vector<1x8x512xbf16> to vector<8x512xbf16>
    %46 = arith.extf %45 : vector<8x512xbf16> to vector<8x512xf32>
    %47 = arith.truncf %41 : vector<8x128xf32> to vector<8x128xbf16>
    %cst_14 = arith.constant dense<0.000000e+00> : vector<8x512xf32>
    %48 = tpu.matmul %47, %3, %cst_14 {dimension_numbers = #tpu.dot_dimension_numbers<[1], [0], [0], [1], [0, 0, 1, 1], [], []>} : vector<8x128xbf16>, vector<128x512xbf16>, vector<8x512xf32> -> vector<8x512xf32>
    %49 = arith.addf %46, %48 : vector<8x512xf32>
    %50 = vector.extract_strided_slice %49 {offsets = [0, 0], sizes = [8, 128], strides = [1, 1]} : vector<8x512xf32> to vector<8x128xf32>
    %51 = arith.negf %50 : vector<8x128xf32>
    %52 = math.exp %51 : vector<8x128xf32>
    %cst_15 = arith.constant 1.000000e+00 : f32
    %53 = vector.broadcast %cst_15 : f32 to vector<8x128xf32>
    %54 = arith.addf %53, %52 : vector<8x128xf32>
    %55 = arith.divf %53, %54 : vector<8x128xf32>
    %56 = vector.extract_strided_slice %49 {offsets = [0, 128], sizes = [8, 128], strides = [1, 1]} : vector<8x512xf32> to vector<8x128xf32>
    %57 = arith.negf %56 : vector<8x128xf32>
    %58 = math.exp %57 : vector<8x128xf32>
    %cst_16 = arith.constant 1.000000e+00 : f32
    %59 = vector.broadcast %cst_16 : f32 to vector<8x128xf32>
    %60 = arith.addf %59, %58 : vector<8x128xf32>
    %61 = arith.divf %59, %60 : vector<8x128xf32>
    %62 = vector.extract_strided_slice %49 {offsets = [0, 256], sizes = [8, 128], strides = [1, 1]} : vector<8x512xf32> to vector<8x128xf32>
    %63 = math.tanh %62 : vector<8x128xf32>
    %64 = vector.extract_strided_slice %49 {offsets = [0, 384], sizes = [8, 128], strides = [1, 1]} : vector<8x512xf32> to vector<8x128xf32>
    %65 = arith.negf %64 : vector<8x128xf32>
    %66 = math.exp %65 : vector<8x128xf32>
    %cst_17 = arith.constant 1.000000e+00 : f32
    %67 = vector.broadcast %cst_17 : f32 to vector<8x128xf32>
    %68 = arith.addf %67, %66 : vector<8x128xf32>
    %69 = arith.divf %67, %68 : vector<8x128xf32>
    %70 = arith.mulf %61, %42 : vector<8x128xf32>
    %71 = arith.mulf %55, %63 : vector<8x128xf32>
    %72 = arith.addf %70, %71 : vector<8x128xf32>
    %73 = math.tanh %72 : vector<8x128xf32>
    %74 = arith.mulf %69, %73 : vector<8x128xf32>
    %75 = arith.addi %4, %c1_i32 : i32
    %c8_i32_18 = arith.constant 8 : i32
    %76 = arith.cmpi slt, %75, %c8_i32_18 : i32
    %77 = arith.select %76, %74, %41 : vector<8x128xf32>
    %78 = arith.select %76, %72, %42 : vector<8x128xf32>
    %c2_i32 = arith.constant 2 : i32
    %79 = arith.index_cast %c2_i32 : i32 to index
    %c0_19 = arith.constant 0 : index
    %c0_20 = arith.constant 0 : index
    %80 = vector.load %arg1[%79, %c0_19, %c0_20] : memref<3x8x512xbf16, #tpu.memory_space<vmem>>, vector<1x8x512xbf16>
    %81 = vector.shape_cast %80 : vector<1x8x512xbf16> to vector<8x512xbf16>
    %82 = arith.extf %81 : vector<8x512xbf16> to vector<8x512xf32>
    %83 = arith.truncf %77 : vector<8x128xf32> to vector<8x128xbf16>
    %cst_21 = arith.constant dense<0.000000e+00> : vector<8x512xf32>
    %84 = tpu.matmul %83, %3, %cst_21 {dimension_numbers = #tpu.dot_dimension_numbers<[1], [0], [0], [1], [0, 0, 1, 1], [], []>} : vector<8x128xbf16>, vector<128x512xbf16>, vector<8x512xf32> -> vector<8x512xf32>
    %85 = arith.addf %82, %84 : vector<8x512xf32>
    %86 = vector.extract_strided_slice %85 {offsets = [0, 0], sizes = [8, 128], strides = [1, 1]} : vector<8x512xf32> to vector<8x128xf32>
    %87 = arith.negf %86 : vector<8x128xf32>
    %88 = math.exp %87 : vector<8x128xf32>
    %cst_22 = arith.constant 1.000000e+00 : f32
    %89 = vector.broadcast %cst_22 : f32 to vector<8x128xf32>
    %90 = arith.addf %89, %88 : vector<8x128xf32>
    %91 = arith.divf %89, %90 : vector<8x128xf32>
    %92 = vector.extract_strided_slice %85 {offsets = [0, 128], sizes = [8, 128], strides = [1, 1]} : vector<8x512xf32> to vector<8x128xf32>
    %93 = arith.negf %92 : vector<8x128xf32>
    %94 = math.exp %93 : vector<8x128xf32>
    %cst_23 = arith.constant 1.000000e+00 : f32
    %95 = vector.broadcast %cst_23 : f32 to vector<8x128xf32>
    %96 = arith.addf %95, %94 : vector<8x128xf32>
    %97 = arith.divf %95, %96 : vector<8x128xf32>
    %98 = vector.extract_strided_slice %85 {offsets = [0, 256], sizes = [8, 128], strides = [1, 1]} : vector<8x512xf32> to vector<8x128xf32>
    %99 = math.tanh %98 : vector<8x128xf32>
    %100 = vector.extract_strided_slice %85 {offsets = [0, 384], sizes = [8, 128], strides = [1, 1]} : vector<8x512xf32> to vector<8x128xf32>
    %101 = arith.negf %100 : vector<8x128xf32>
    %102 = math.exp %101 : vector<8x128xf32>
    %cst_24 = arith.constant 1.000000e+00 : f32
    %103 = vector.broadcast %cst_24 : f32 to vector<8x128xf32>
    %104 = arith.addf %103, %102 : vector<8x128xf32>
    %105 = arith.divf %103, %104 : vector<8x128xf32>
    %106 = arith.mulf %97, %78 : vector<8x128xf32>
    %107 = arith.mulf %91, %99 : vector<8x128xf32>
    %108 = arith.addf %106, %107 : vector<8x128xf32>
    %109 = math.tanh %108 : vector<8x128xf32>
    %110 = arith.mulf %105, %109 : vector<8x128xf32>
    %111 = arith.addi %4, %c2_i32 : i32
    %c8_i32_25 = arith.constant 8 : i32
    %112 = arith.cmpi slt, %111, %c8_i32_25 : i32
    %113 = arith.select %112, %110, %77 : vector<8x128xf32>
    %114 = arith.select %112, %108, %78 : vector<8x128xf32>
    %c3_i32_26 = arith.constant 3 : i32
    %c0_27 = arith.constant 0 : index
    %c0_28 = arith.constant 0 : index
    %115 = vector.load %arg6[%c0_27, %c0_28] : memref<8x128xf32, #tpu.memory_space<vmem>>, vector<8x128xf32>
    tpu.vector_store %arg6[%c0_27, %c0_28], %113 {strides = array<i32>} : memref<8x128xf32, #tpu.memory_space<vmem>>, vector<8x128xf32>,
    %c0_29 = arith.constant 0 : index
    %c0_30 = arith.constant 0 : index
    %116 = vector.load %arg7[%c0_29, %c0_30] : memref<8x128xf32, #tpu.memory_space<vmem>>, vector<8x128xf32>
    tpu.vector_store %arg7[%c0_29, %c0_30], %114 {strides = array<i32>} : memref<8x128xf32, #tpu.memory_space<vmem>>, vector<8x128xf32>,
    %c2_i32_31 = arith.constant 2 : i32
    %117 = arith.cmpi eq, %arg0, %c2_i32_31 : i32
    %118 = arith.extui %117 : i1 to i32
    %c0_i32_32 = arith.constant 0 : i32
    %119 = arith.cmpi ne, %118, %c0_i32_32 : i32
    scf.if %119 {
      %c0_33 = arith.constant 0 : index
      %c0_34 = arith.constant 0 : index
      %120 = vector.load %arg3[%c0_33, %c0_34] : memref<128x128xf32, #tpu.memory_space<vmem>>, vector<128x128xf32>
      %cst_35 = arith.constant dense<0.000000e+00> : vector<8x128xf32>
      %121 = tpu.matmul %113, %120, %cst_35 {dimension_numbers = #tpu.dot_dimension_numbers<[1], [0], [0], [1], [0, 0, 1, 1], [], []>} : vector<8x128xf32>, vector<128x128xf32>, vector<8x128xf32> -> vector<8x128xf32>
      %c0_36 = arith.constant 0 : index
      %c0_37 = arith.constant 0 : index
      %122 = vector.load %arg4[%c0_36, %c0_37] : memref<1x128xf32, #tpu.memory_space<vmem>>, vector<1x128xf32>
      %123 = vector.broadcast %122 : vector<1x128xf32> to vector<8x128xf32>
      %124 = arith.addf %121, %123 : vector<8x128xf32>
      %c0_38 = arith.constant 0 : index
      %c0_39 = arith.constant 0 : index
      %125 = vector.load %arg5[%c0_38, %c0_39] : memref<8x128xf32, #tpu.memory_space<vmem>>, vector<8x128xf32>
      tpu.vector_store %arg5[%c0_38, %c0_39], %124 {strides = array<i32>} : memref<8x128xf32, #tpu.memory_space<vmem>>, vector<8x128xf32>,
    } else {
    }
    return
  }
  func.func @transform_0(%arg0: i32) -> (i32, i32, i32) {
    %c0_i32 = arith.constant 0 : i32
    %c0_i32_0 = arith.constant 0 : i32
    %c0_i32_1 = arith.constant 0 : i32
    return %arg0, %c0_i32, %c0_i32_0 : i32, i32, i32
  }
  func.func @transform_1(%arg0: i32) -> (i32, i32) {
    %c0_i32 = arith.constant 0 : i32
    %c0_i32_0 = arith.constant 0 : i32
    %c0_i32_1 = arith.constant 0 : i32
    return %c0_i32, %c0_i32_0 : i32, i32
  }
  func.func @transform_2(%arg0: i32) -> (i32, i32) {
    %c0_i32 = arith.constant 0 : i32
    %c0_i32_0 = arith.constant 0 : i32
    %c0_i32_1 = arith.constant 0 : i32
    return %c0_i32, %c0_i32_0 : i32, i32
  }
  func.func @transform_3(%arg0: i32) -> (i32, i32) {
    %c0_i32 = arith.constant 0 : i32
    %c0_i32_0 = arith.constant 0 : i32
    %c0_i32_1 = arith.constant 0 : i32
    return %c0_i32, %c0_i32_0 : i32, i32
  }
  func.func @transform_4(%arg0: i32) -> (i32, i32) {
    %c0_i32 = arith.constant 0 : i32
    %c0_i32_0 = arith.constant 0 : i32
    %c0_i32_1 = arith.constant 0 : i32
    return %c0_i32, %c0_i32_0 : i32, i32
  }
}

</mosaic_0001>

<llo_original>
// kernel: tpu_custom_call.1
$region0: #{tpu_custom_call.1}
  #allocation0 [shape = 'u32[]', space=smem, size = 0x4, offset = 0x4, fixed_abs, tag = 'smem constant byte address 0x4 - core index']
  #allocation1 [shape = 'u32[144,128]{1,0:T(1,128)}', space=vmem, size = 0x12000, scoped, tag = 'internal scratch']
  #allocation2 [shape = 'f32[8,128]{1,0:T(8,128)}', space=vmem, size = 0x1000, scoped, tag = 'scratch operand']
  #allocation3 [shape = 'f32[8,128]{1,0:T(8,128)}', space=vmem, size = 0x1000, scoped, tag = 'scratch operand']
  %s0 = inlined_call_operand.hbm [shape: bf16[9,8,512], index: 0, kind: input, shape index: {}]
  %s1 = inlined_call_operand.hbm [shape: bf16[128,512], index: 1, kind: input, shape index: {}]
  %s2 = inlined_call_operand.hbm [shape: f32[128,128], index: 2, kind: input, shape index: {}]
  %s3 = inlined_call_operand.vmem [shape: f32[1,128], index: 3, kind: input, shape index: {}]
  %s4 = inlined_call_operand.hbm [shape: f32[8,128], index: 4, kind: output, shape index: {}]
  %s5 = sld [smem:[#allocation0]]
  $region69: #{tpu_custom_call.1} parent=0
    _
  %s7 = ssub.s32 1, %s5
  %s8 = scalar_select 0, %s7, %s5
  $region1: #{tpu_custom_call.1} parent=0
    #allocation4 [shape = 'u8[49152]{0}', space=vmem, size = 0xc000, scoped, tag = 'input window, operand 0']
    #allocation5 [shape = 's32[2]{0}', space=sflag, size = 0x8, scoped, tag = 'scoped memory for tpu_custom_call.1']
    #allocation6 [shape = 's32[2]{0}', space=sflag, size = 0x8, scoped, tag = 'scoped memory for tpu_custom_call.1']
    #allocation7 [shape = 'u8[131072]{0}', space=vmem, size = 0x20000, scoped, tag = 'input window, operand 1, single buffered']
    #allocation8 [shape = 's32[1]{0}', space=sflag, size = 0x4, scoped, tag = 'scoped memory for tpu_custom_call.1']
    #allocation9 [shape = 'u8[65536]{0}', space=vmem, size = 0x10000, scoped, tag = 'input window, operand 2, single buffered']
    #allocation10 [shape = 'u8[4096]{0}', space=vmem, size = 0x1000, scoped, tag = 'output window, operand 0, single buffered']
    %9 = vsyncpa [#allocation5], 0
    %s10 = scalar_lea.sflag [#allocation5], 1
    %11 = vsyncpa %s10, 0
    %12 = vsyncpa [#allocation8], 0
    %13 = vsyncpa [#allocation6], 0
    loop: start=0, step=1, limit=5
    $region2: #{tpu_custom_call.1} parent=1 // loop_pre_header
      _
    $region3: #{tpu_custom_call.1} parent=1 // loop_header
      %s15 = sphi 0, %s19
      %p16 = scmp.ge.s32.totalorder %s15, 5
      %s25 = sphi 0, %s27
      %s28 = sphi 0, %s25
      %s29 = sphi 0, %s28
      %s45 = sphi 0, %s29
      %s49 = sphi 0, %s49
      %s51 = sphi 0, %s49
      %s52 = sphi 0, %s51
      %s66 = sphi 0, %s52
      %s70 = sphi 0, %s70
      %s72 = sphi 0, %s70
      %s73 = sphi 0, %s72
      %s87 = sphi 0, %s73
      %s91 = sphi 0, %s91
      %s93 = sphi 0, %s91
      %s94 = sphi 0, %s93
      %s108 = sphi 0, %s94
      %s112 = sphi 0, %s112
      %s114 = sphi 0, %s112
      %s115 = sphi 0, %s114
      %s129 = sphi 0, %s115
    $region4: #{tpu_custom_call.1} parent=1 // loop_header_branch
      %18 = sbr.rel (%p16) target = $region8
    $region5: #{tpu_custom_call.1} parent=1 // loop_body
      %s20 = ssub.s32 %s15, 1
      %s21 = ssub.s32 %s15, 2
      %s22 = sadd.s32 %s15, 1
      %s23 = ssub.s32 %s15, %s22
      %p24 = scmp.eq.s32.totalorder %s23, 0
      %s26 = sadd.s32 %s25, 1
      %s27 = scalar_select %p24, %s25, %s26
      %p30 = pneg %p24
      %p31 = scmp.eq.s32.totalorder %s15, 2
      %p32 = por %p30, %p31
      %p33 = scmp.ne.s32.totalorder %s25, %s28
      %p34 = scmp.eq.s32.totalorder %s15, 0
      %p35 = por %p33, %p34
      %p36 = scmp.ne.s32.totalorder %s25, %s28
      %p37 = scmp.eq.s32.totalorder %s20, 2
      %p38 = por %p36, %p37
      %p39 = scmp.ne.s32.totalorder %s28, %s29
      %p40 = scmp.eq.s32.totalorder %s20, 0
      %p41 = por %p39, %p40
      %p42 = scmp.ne.s32.totalorder %s28, %s29
      %p43 = scmp.eq.s32.totalorder %s21, 2
      %p44 = por %p42, %p43
      %p46 = scmp.ne.s32.totalorder %s29, %s45
      %p47 = scmp.eq.s32.totalorder %s21, 0
      %p48 = por %p46, %p47
      %s50 = sadd.s32 %s49, 1
      %p53 = scmp.eq.s32.totalorder %s15, 2
      %p54 = scmp.ne.s32.totalorder %s49, %s51
      %p55 = scmp.eq.s32.totalorder %s15, 0
      %p56 = por %p54, %p55
      %p57 = scmp.ne.s32.totalorder %s49, %s51
      %p58 = scmp.eq.s32.totalorder %s20, 2
      %p59 = por %p57, %p58
      %p60 = scmp.ne.s32.totalorder %s51, %s52
      %p61 = scmp.eq.s32.totalorder %s20, 0
      %p62 = por %p60, %p61
      %p63 = scmp.ne.s32.totalorder %s51, %s52
      %p64 = scmp.eq.s32.totalorder %s21, 2
      %p65 = por %p63, %p64
      %p67 = scmp.ne.s32.totalorder %s52, %s66
      %p68 = scmp.eq.s32.totalorder %s21, 0
      %p69 = por %p67, %p68
      %s71 = sadd.s32 %s70, 1
      %p74 = scmp.eq.s32.totalorder %s15, 2
      %p75 = scmp.ne.s32.totalorder %s70, %s72
      %p76 = scmp.eq.s32.totalorder %s15, 0
      %p77 = por %p75, %p76
      %p78 = scmp.ne.s32.totalorder %s70, %s72
      %p79 = scmp.eq.s32.totalorder %s20, 2
      %p80 = por %p78, %p79
      %p81 = scmp.ne.s32.totalorder %s72, %s73
      %p82 = scmp.eq.s32.totalorder %s20, 0
      %p83 = por %p81, %p82
      %p84 = scmp.ne.s32.totalorder %s72, %s73
      %p85 = scmp.eq.s32.totalorder %s21, 2
      %p86 = por %p84, %p85
      %p88 = scmp.ne.s32.totalorder %s73, %s87
      %p89 = scmp.eq.s32.totalorder %s21, 0
      %p90 = por %p88, %p89
      %s92 = sadd.s32 %s91, 1
      %p95 = scmp.eq.s32.totalorder %s15, 2
      %p96 = scmp.ne.s32.totalorder %s91, %s93
      %p97 = scmp.eq.s32.totalorder %s15, 0
      %p98 = por %p96, %p97
      %p99 = scmp.ne.s32.totalorder %s91, %s93
      %p100 = scmp.eq.s32.totalorder %s20, 2
      %p101 = por %p99, %p100
      %p102 = scmp.ne.s32.totalorder %s93, %s94
      %p103 = scmp.eq.s32.totalorder %s20, 0
      %p104 = por %p102, %p103
      %p105 = scmp.ne.s32.totalorder %s93, %s94
      %p106 = scmp.eq.s32.totalorder %s21, 2
      %p107 = por %p105, %p106
      %p109 = scmp.ne.s32.totalorder %s94, %s108
      %p110 = scmp.eq.s32.totalorder %s21, 0
      %p111 = por %p109, %p110
      %s113 = sadd.s32 %s112, 1
      %p116 = scmp.eq.s32.totalorder %s15, 2
      %p117 = scmp.ne.s32.totalorder %s112, %s114
      %p118 = scmp.eq.s32.totalorder %s15, 0
      %p119 = por %p117, %p118
      %p120 = scmp.ne.s32.totalorder %s112, %s114
      %p121 = scmp.eq.s32.totalorder %s20, 2
      %p122 = por %p120, %p121
      %p123 = scmp.ne.s32.totalorder %s114, %s115
      %p124 = scmp.eq.s32.totalorder %s20, 0
      %p125 = por %p123, %p124
      %p126 = scmp.ne.s32.totalorder %s114, %s115
      %p127 = scmp.eq.s32.totalorder %s21, 2
      %p128 = por %p126, %p127
      %p130 = scmp.ne.s32.totalorder %s115, %s129
      %p131 = scmp.eq.s32.totalorder %s21, 0
      %p132 = por %p130, %p131
      %p133 = scmp.le.s32.totalorder 1, %s15
      %p134 = scmp.lt.s32.totalorder %s15, 4
      %p135 = pnand %p133, %p134
      %p136 = pneg %p135
      // Predicated region
      $region9: #{tpu_custom_call.1} parent=5 // pred_check
        _
      $region10: #{tpu_custom_call.1} parent=5 // pred_check_branch
        %138 = sbr.rel (%p135) target = $region12
      $region11: #{tpu_custom_call.1} parent=5 // pred_region
        %s139 = ssub.s32 %s15, 1
        // Predicated region
        $region13: #{tpu_custom_call.1} parent=11 // pred_check
          %p140 = pneg %p62
        $region14: #{tpu_custom_call.1} parent=11 // pred_check_branch
          %142 = sbr.rel (%p140) target = $region16
        $region15: #{tpu_custom_call.1} parent=11 // pred_region
          %s144 = ssub.s32 4096, 4096
          %145 = vsyncadd [#allocation8], %s144
          %s146 = sshll.u32 [#allocation7], 4
          %s147 = int_to_ptr.vmem [resolvable:$true] %s146
          %152 = dma.hbm_to_vmem [thread:$0]  %s1, 4096, %s147, [#allocation8], 256, 256, 16
        $region16: #{tpu_custom_call.1} parent=11 // pred_fallthru
          _
        // Predicated region
        $region17: #{tpu_custom_call.1} parent=11 // pred_check
          %p153 = pneg %p83
        $region18: #{tpu_custom_call.1} parent=11 // pred_check_branch
          %155 = sbr.rel (%p153) target = $region20
        $region19: #{tpu_custom_call.1} parent=11 // pred_region
          %s157 = ssub.s32 2048, 2048
          %158 = vsyncadd [#allocation8], %s157
          %s159 = sshll.u32 [#allocation9], 4
          %s160 = int_to_ptr.vmem [resolvable:$true] %s159
          %165 = dma.hbm_to_vmem [thread:$0]  %s2, 2048, %s160, [#allocation8], 128, 128, 8
        $region20: #{tpu_custom_call.1} parent=11 // pred_fallthru
          _
        // Predicated region
        $region21: #{tpu_custom_call.1} parent=11 // pred_check
          %p166 = pneg %p104
        $region22: #{tpu_custom_call.1} parent=11 // pred_check_branch
          %168 = sbr.rel (%p166) target = $region24
        $region23: #{tpu_custom_call.1} parent=11 // pred_region
          _
        $region24: #{tpu_custom_call.1} parent=11 // pred_fallthru
          _
      $region12: #{tpu_custom_call.1} parent=5 // pred_fallthru
        _
      %p169 = scmp.lt.s32.totalorder %s15, 3
      // Predicated region
      $region25: #{tpu_custom_call.1} parent=5 // pred_check
        %p170 = pneg %p169
      $region26: #{tpu_custom_call.1} parent=5 // pred_check_branch
        %172 = sbr.rel (%p170) target = $region28
      $region27: #{tpu_custom_call.1} parent=5 // pred_region
        // Predicated region
        $region29: #{tpu_custom_call.1} parent=27 // pred_check
          %p173 = pneg %p35
        $region30: #{tpu_custom_call.1} parent=27 // pred_check_branch
          %175 = sbr.rel (%p173) target = $region32
        $region31: #{tpu_custom_call.1} parent=27 // pred_region
          %s176 = sand.u32 %s25, 1
          %s177 = scalar_lea.sflag [#allocation5], %s176
          %s178 = sand.u32 %s25, 1
          %s179 = smul.addr %s178, 48
          %s180 = scalar_lea.vmem [#allocation4], %s179
          %s181 = smul.u32 3, %s15
          %s183 = ssub.s32 768, 768
          %184 = vsyncadd %s177, %s183
          %s185 = smul.addr %s181, 4
          %s186 = smul.addr %s185, 64
          %s187 = scalar_lea.hbm %s0, %s186
          %s188 = sshll.u32 %s180, 4
          %s189 = int_to_ptr.vmem [resolvable:$true] %s188
          %194 = dma.hbm_to_vmem [thread:$0]  %s187, 768, %s189, %s177, 256, 256, 16
        $region32: #{tpu_custom_call.1} parent=27 // pred_fallthru
          _
      $region28: #{tpu_custom_call.1} parent=5 // pred_fallthru
        _
      %p195 = scmp.le.s32.totalorder 1, %s15
      %p196 = scmp.lt.s32.totalorder %s15, 4
      %p197 = pnand %p195, %p196
      %p198 = pneg %p197
      // Predicated region
      $region33: #{tpu_custom_call.1} parent=5 // pred_check
        _
      $region34: #{tpu_custom_call.1} parent=5 // pred_check_branch
        %200 = sbr.rel (%p197) target = $region36
      $region35: #{tpu_custom_call.1} parent=5 // pred_region
        %s201 = ssub.s32 %s15, 1
        %s202 = sand.u32 %s28, 1
        %s203 = scalar_lea.sflag [#allocation5], %s202
        %s204 = sand.u32 %s28, 1
        %s205 = smul.addr %s204, 48
        %s206 = scalar_lea.vmem [#allocation4], %s205
        // Predicated region
        $region37: #{tpu_custom_call.1} parent=35 // pred_check
          %p207 = pneg %p41
        $region38: #{tpu_custom_call.1} parent=35 // pred_check_branch
          %209 = sbr.rel (%p207) target = $region40
        $region39: #{tpu_custom_call.1} parent=35 // pred_region
          %210 = dma.done %s203, 768
        $region40: #{tpu_custom_call.1} parent=35 // pred_fallthru
          _
        // Predicated region
        $region41: #{tpu_custom_call.1} parent=35 // pred_check
          %p211 = pneg %p62
        $region42: #{tpu_custom_call.1} parent=35 // pred_check_branch
          %213 = sbr.rel (%p211) target = $region44
        $region43: #{tpu_custom_call.1} parent=35 // pred_region
          %214 = dma.done [#allocation8], 4096
        $region44: #{tpu_custom_call.1} parent=35 // pred_fallthru
          _
        // Predicated region
        $region45: #{tpu_custom_call.1} parent=35 // pred_check
          %p215 = pneg %p83
        $region46: #{tpu_custom_call.1} parent=35 // pred_check_branch
          %217 = sbr.rel (%p215) target = $region48
        $region47: #{tpu_custom_call.1} parent=35 // pred_region
          %218 = dma.done [#allocation8], 2048
        $region48: #{tpu_custom_call.1} parent=35 // pred_fallthru
          _
        %s219 = sand.u32 %s28, 1
        %s220 = scalar_lea.sflag [#allocation5], %s219
        %s221 = sand.u32 %s28, 1
        %s222 = smul.addr %s221, 48
        %s223 = scalar_lea.vmem [#allocation4], %s222
        %p224 = pneg %p41
        %p225 = pneg %p38
        %p226 = pneg %p62
        %p227 = pneg %p59
        %p228 = pneg %p83
        %p229 = pneg %p80
        %p230 = pneg %p104
        %p231 = pneg %p101
        %p232 = pneg %p125
        %p233 = pneg %p122
        %s234 = smul.u32 3, %s20
        %p236 = scmp.eq.s32.totalorder %s20, 0
        // Predicated region
        $region49: #{tpu_custom_call.1} parent=35 // pred_check
          %p237 = pneg %p236
        $region50: #{tpu_custom_call.1} parent=35 // pred_check_branch
          %239 = sbr.rel (%p237) target = $region52
        $region51: #{tpu_custom_call.1} parent=35 // pred_region
          %240 = vst [vmem:[#allocation2] sm:$0xff] 0.0
          %241 = vst [vmem:[#allocation3] sm:$0xff] 0.0
        $region52: #{tpu_custom_call.1} parent=35 // pred_fallthru
          _
        %v242 = vld [vmem:[#allocation7] sm:$0xff]
        %v243 = vld [vmem:[#allocation7 + $0x8] sm:$0xff]
        %v244 = vld [vmem:[#allocation7 + $0x10] sm:$0xff]
        %v245 = vld [vmem:[#allocation7 + $0x18] sm:$0xff]
        %v246 = vld [vmem:[#allocation7 + $0x20] sm:$0xff]
        %v247 = vld [vmem:[#allocation7 + $0x28] sm:$0xff]
        %v248 = vld [vmem:[#allocation7 + $0x30] sm:$0xff]
        %v249 = vld [vmem:[#allocation7 + $0x38] sm:$0xff]
        %v250 = vld [vmem:[#allocation7 + $0x40] sm:$0xff]
        %v251 = vld [vmem:[#allocation7 + $0x48] sm:$0xff]
        %v252 = vld [vmem:[#allocation7 + $0x50] sm:$0xff]
        %v253 = vld [vmem:[#allocation7 + $0x58] sm:$0xff]
        %v254 = vld [vmem:[#allocation7 + $0x60] sm:$0xff]
        %v255 = vld [vmem:[#allocation7 + $0x68] sm:$0xff]
        %v256 = vld [vmem:[#allocation7 + $0x70] sm:$0xff]
        %v257 = vld [vmem:[#allocation7 + $0x78] sm:$0xff]
        %v258 = vld [vmem:[#allocation7 + $0x80] sm:$0xff]
        %v259 = vld [vmem:[#allocation7 + $0x88] sm:$0xff]
        %v260 = vld [vmem:[#allocation7 + $0x90] sm:$0xff]
        %v261 = vld [vmem:[#allocation7 + $0x98] sm:$0xff]
        %v262 = vld [vmem:[#allocation7 + $0xa0] sm:$0xff]
        %v263 = vld [vmem:[#allocation7 + $0xa8] sm:$0xff]
        %v264 = vld [vmem:[#allocation7 + $0xb0] sm:$0xff]
        %v265 = vld [vmem:[#allocation7 + $0xb8] sm:$0xff]
        %v266 = vld [vmem:[#allocation7 + $0xc0] sm:$0xff]
        %v267 = vld [vmem:[#allocation7 + $0xc8] sm:$0xff]
        %v268 = vld [vmem:[#allocation7 + $0xd0] sm:$0xff]
        %v269 = vld [vmem:[#allocation7 + $0xd8] sm:$0xff]
        %v270 = vld [vmem:[#allocation7 + $0xe0] sm:$0xff]
        %v271 = vld [vmem:[#allocation7 + $0xe8] sm:$0xff]
        %v272 = vld [vmem:[#allocation7 + $0xf0] sm:$0xff]
        %v273 = vld [vmem:[#allocation7 + $0xf8] sm:$0xff]
        %s274 = smul.u32 %s20, 3
        %v275 = vld [vmem:[#allocation2] sm:$0xff]
        %v276 = vld [vmem:[#allocation3] sm:$0xff]
        %v277 = vld [vmem:[%s206] sm:$0xff]
        %v278 = vld [vmem:[%s206 + $0x8] sm:$0xff]
        %v279 = vunpack.c.l.bf16 %v277
        %v280 = vunpack.c.h.bf16 %v277
        %v281 = vunpack.c.l.bf16 %v278
        %v282 = vunpack.c.h.bf16 %v278
        %v283 = vpack.c.bf16 %v275, %v275
        %v316 = vunpack.c.l.b16 %v242
        %v317 = vunpack.c.h.b16 %v242
        %v318 = vunpack.c.l.b16 %v243
        %v319 = vunpack.c.h.b16 %v243
        %v320 = vunpack.c.l.b16 %v244
        %v321 = vunpack.c.h.b16 %v244
        %v322 = vunpack.c.l.b16 %v245
        %v323 = vunpack.c.h.b16 %v245
        %v324 = vunpack.c.l.b16 %v246
        %v325 = vunpack.c.h.b16 %v246
        %v326 = vunpack.c.l.b16 %v247
        %v327 = vunpack.c.h.b16 %v247
        %v328 = vunpack.c.l.b16 %v248
        %v329 = vunpack.c.h.b16 %v248
        %v330 = vunpack.c.l.b16 %v249
        %v331 = vunpack.c.h.b16 %v249
        %v332 = vunpack.c.l.b16 %v250
        %v333 = vunpack.c.h.b16 %v250
        %v334 = vunpack.c.l.b16 %v251
        %v335 = vunpack.c.h.b16 %v251
        %v336 = vunpack.c.l.b16 %v252
        %v337 = vunpack.c.h.b16 %v252
        %v338 = vunpack.c.l.b16 %v253
        %v339 = vunpack.c.h.b16 %v253
        %v340 = vunpack.c.l.b16 %v254
        %v341 = vunpack.c.h.b16 %v254
        %v342 = vunpack.c.l.b16 %v255
        %v343 = vunpack.c.h.b16 %v255
        %v344 = vunpack.c.l.b16 %v256
        %v345 = vunpack.c.h.b16 %v256
        %v346 = vunpack.c.l.b16 %v257
        %v347 = vunpack.c.h.b16 %v257
        %v348 = vunpack.c.l.b16 %v258
        %v349 = vunpack.c.h.b16 %v258
        %v350 = vunpack.c.l.b16 %v259
        %v351 = vunpack.c.h.b16 %v259
        %v352 = vunpack.c.l.b16 %v260
        %v353 = vunpack.c.h.b16 %v260
        %v354 = vunpack.c.l.b16 %v261
        %v355 = vunpack.c.h.b16 %v261
        %v356 = vunpack.c.l.b16 %v262
        %v357 = vunpack.c.h.b16 %v262
        %v358 = vunpack.c.l.b16 %v263
        %v359 = vunpack.c.h.b16 %v263
        %v360 = vunpack.c.l.b16 %v264
        %v361 = vunpack.c.h.b16 %v264
        %v362 = vunpack.c.l.b16 %v265
        %v363 = vunpack.c.h.b16 %v265
        %v364 = vunpack.c.l.b16 %v266
        %v365 = vunpack.c.h.b16 %v266
        %v366 = vunpack.c.l.b16 %v267
        %v367 = vunpack.c.h.b16 %v267
        %v368 = vunpack.c.l.b16 %v268
        %v369 = vunpack.c.h.b16 %v268
        %v370 = vunpack.c.l.b16 %v269
        %v371 = vunpack.c.h.b16 %v269
        %v372 = vunpack.c.l.b16 %v270
        %v373 = vunpack.c.h.b16 %v270
        %v374 = vunpack.c.l.b16 %v271
        %v375 = vunpack.c.h.b16 %v271
        %v376 = vunpack.c.l.b16 %v272
        %v377 = vunpack.c.h.b16 %v272
        %v378 = vunpack.c.l.b16 %v273
        %v379 = vunpack.c.h.b16 %v273
        %v380 = vpack.c.b16 %v320, %v316
        %v381 = vpack.c.b16 %v321, %v317
        %v382 = vpack.c.b16 %v322, %v318
        %v383 = vpack.c.b16 %v323, %v319
        %v384 = vpack.c.b16 %v328, %v324
        %v385 = vpack.c.b16 %v329, %v325
        %v386 = vpack.c.b16 %v330, %v326
        %v387 = vpack.c.b16 %v331, %v327
        %v388 = vpack.c.b16 %v336, %v332
        %v389 = vpack.c.b16 %v337, %v333
        %v390 = vpack.c.b16 %v338, %v334
        %v391 = vpack.c.b16 %v339, %v335
        %v392 = vpack.c.b16 %v344, %v340
        %v393 = vpack.c.b16 %v345, %v341
        %v394 = vpack.c.b16 %v346, %v342
        %v395 = vpack.c.b16 %v347, %v343
        %v396 = vpack.c.b16 %v352, %v348
        %v397 = vpack.c.b16 %v353, %v349
        %v398 = vpack.c.b16 %v354, %v350
        %v399 = vpack.c.b16 %v355, %v351
        %v400 = vpack.c.b16 %v360, %v356
        %v401 = vpack.c.b16 %v361, %v357
        %v402 = vpack.c.b16 %v362, %v358
        %v403 = vpack.c.b16 %v363, %v359
        %v404 = vpack.c.b16 %v368, %v364
        %v405 = vpack.c.b16 %v369, %v365
        %v406 = vpack.c.b16 %v370, %v366
        %v407 = vpack.c.b16 %v371, %v367
        %v408 = vpack.c.b16 %v376, %v372
        %v409 = vpack.c.b16 %v377, %v373
        %v410 = vpack.c.b16 %v378, %v374
        %v411 = vpack.c.b16 %v379, %v375
        %444 = vmatprep.subr.bf16.mxu0 %v409
        %445 = vmatpush1.bf16.msra.mxu0 %v408
        %446 = vmatprep.subr.bf16.mxu0 %v405
        %447 = vmatpush1.bf16.msra.mxu0 %v404
        %448 = vmatprep.subr.bf16.mxu0 %v401
        %449 = vmatpush1.bf16.msra.mxu0 %v400
        %450 = vmatprep.subr.bf16.mxu0 %v397
        %451 = vmatpush1.bf16.msra.mxu0 %v396
        %452 = vmatprep.subr.bf16.mxu0 %v393
        %453 = vmatpush1.bf16.msra.mxu0 %v392
        %454 = vmatprep.subr.bf16.mxu0 %v389
        %455 = vmatpush1.bf16.msra.mxu0 %v388
        %456 = vmatprep.subr.bf16.mxu0 %v385
        %457 = vmatpush1.bf16.msra.mxu0 %v384
        %458 = vmatprep.subr.bf16.mxu0 %v381
        %459 = vmatpush1.bf16.msra.mxu0 %v380
        %460 = vmatprep.subr.bf16.mxu0 0
        %461 = vmatpush2.bf16.msra.mxu0 0
        %462 = vmatprep.subr.bf16.mxu0 0
        %463 = vmatpush2.bf16.msra.mxu0 0
        %464 = vmatprep.subr.bf16.mxu0 0
        %465 = vmatpush2.bf16.msra.mxu0 0
        %466 = vmatprep.subr.bf16.mxu0 0
        %467 = vmatpush2.bf16.msra.mxu0 0
        %468 = vmatprep.subr.bf16.mxu0 0
        %469 = vmatpush2.bf16.msra.mxu0 0
        %470 = vmatprep.subr.bf16.mxu0 0
        %471 = vmatpush2.bf16.msra.mxu0 0
        %472 = vmatprep.subr.bf16.mxu0 0
        %473 = vmatpush2.bf16.msra.mxu0 0
        %474 = vmatprep.subr.bf16.mxu0 0
        %475 = vmatpush2.bf16.msra.mxu0 0
        %476 = vmatprep.mubr.bf16.mxu0 0
        %477 = vmatmul.mubr.bf16.gmra.mxu0 %v283
        %v478 = vpop.f32.mrf.mxu0
        %v479 = vadd.f32 0.0, %v478
        %v480 = vpop.f32.mrf.mxu0
        %v481 = vadd.f32 0.0, %v480
        %v482 = vpop.f32.mrf.mxu0
        %v483 = vpop.f32.mrf.mxu0
        %484 = vdwg.mxu0
        %485 = vmatprep.subr.bf16.mxu0 %v411
        %486 = vmatpush1.bf16.msra.mxu0 %v410
        %487 = vmatprep.subr.bf16.mxu0 %v407
        %488 = vmatpush1.bf16.msra.mxu0 %v406
        %489 = vmatprep.subr.bf16.mxu0 %v403
        %490 = vmatpush1.bf16.msra.mxu0 %v402
        %491 = vmatprep.subr.bf16.mxu0 %v399
        %492 = vmatpush1.bf16.msra.mxu0 %v398
        %493 = vmatprep.subr.bf16.mxu0 %v395
        %494 = vmatpush1.bf16.msra.mxu0 %v394
        %495 = vmatprep.subr.bf16.mxu0 %v391
        %496 = vmatpush1.bf16.msra.mxu0 %v390
        %497 = vmatprep.subr.bf16.mxu0 %v387
        %498 = vmatpush1.bf16.msra.mxu0 %v386
        %499 = vmatprep.subr.bf16.mxu0 %v383
        %500 = vmatpush1.bf16.msra.mxu0 %v382
        %501 = vmatprep.subr.bf16.mxu0 0
        %502 = vmatpush2.bf16.msra.mxu0 0
        %503 = vmatprep.subr.bf16.mxu0 0
        %504 = vmatpush2.bf16.msra.mxu0 0
        %505 = vmatprep.subr.bf16.mxu0 0
        %506 = vmatpush2.bf16.msra.mxu0 0
        %507 = vmatprep.subr.bf16.mxu0 0
        %508 = vmatpush2.bf16.msra.mxu0 0
        %509 = vmatprep.subr.bf16.mxu0 0
        %510 = vmatpush2.bf16.msra.mxu0 0
        %511 = vmatprep.subr.bf16.mxu0 0
        %512 = vmatpush2.bf16.msra.mxu0 0
        %513 = vmatprep.subr.bf16.mxu0 0
        %514 = vmatpush2.bf16.msra.mxu0 0
        %515 = vmatprep.subr.bf16.mxu0 0
        %516 = vmatpush2.bf16.msra.mxu0 0
        %517 = vmatprep.mubr.bf16.mxu0 0
        %518 = vmatmul.mubr.bf16.gmra.mxu0 %v283
        %v519 = vpop.f32.mrf.mxu0
        %v520 = vadd.f32 0.0, %v519
        %v521 = vpop.f32.mrf.mxu0
        %v522 = vadd.f32 0.0, %v521
        %v523 = vpop.f32.mrf.mxu0
        %v524 = vpop.f32.mrf.mxu0
        %525 = vdwg.mxu0
        %v526 = vadd.f32 %v279, %v479
        %v527 = vadd.f32 %v280, %v481
        %v528 = vadd.f32 %v281, %v520
        %v529 = vadd.f32 %v282, %v522
        %v530 = vxor.u32 %v526, 2147483648
        %v531 = vmul.f32 %v530, 1.442695
        %v532 = vpow.pop %v531
        %v533 = vadd.f32 %v532, 1.0
        %v534 = vrcp.pop %v533
        %v535 = vmul.f32 1.0, %v534
        %v536 = vxor.u32 %v527, 2147483648
        %v537 = vmul.f32 %v536, 1.442695
        %v538 = vpow.pop %v537
        %v539 = vadd.f32 %v538, 1.0
        %v540 = vrcp.pop %v539
        %v541 = vmul.f32 1.0, %v540
        %v542 = vtanh.pop %v528
        %v543 = vxor.u32 %v529, 2147483648
        %v544 = vmul.f32 %v543, 1.442695
        %v545 = vpow.pop %v544
        %v546 = vadd.f32 %v545, 1.0
        %v547 = vrcp.pop %v546
        %v548 = vmul.f32 1.0, %v547
        %v549 = vmul.f32 %v541, %v276
        %v550 = vmul.f32 %v535, %v542
        %v551 = vadd.f32 %v549, %v550
        %v552 = vtanh.pop %v551
        %v553 = vmul.f32 %v548, %v552
        %p554 = scmp.lt.s32.totalorder %s274, 8
        %s555 = scalar_select %p554, 1, 0
        %v556 = vstv %s555
        %vm557 = vcmp.eq.s32.totalorder %v556, 1
        %v558 = vsel %vm557, %v553, %v275
        %v559 = vsel %vm557, %v551, %v276
        %s560 = scalar_lea.vmem %s206, 16 [#allocation4]
        %v561 = vld [vmem:[%s560] sm:$0xff]
        %v562 = vld [vmem:[%s560 + $0x8] sm:$0xff]
        %v563 = vunpack.c.l.bf16 %v561
        %v564 = vunpack.c.h.bf16 %v561
        %v565 = vunpack.c.l.bf16 %v562
        %v566 = vunpack.c.h.bf16 %v562
        %v567 = vpack.c.bf16 %v558, %v558
        %568 = vmatprep.subr.bf16.mxu0 %v409
        %569 = vmatpush1.bf16.msra.mxu0 %v408
        %570 = vmatprep.subr.bf16.mxu0 %v405
        %571 = vmatpush1.bf16.msra.mxu0 %v404
        %572 = vmatprep.subr.bf16.mxu0 %v401
        %573 = vmatpush1.bf16.msra.mxu0 %v400
        %574 = vmatprep.subr.bf16.mxu0 %v397
        %575 = vmatpush1.bf16.msra.mxu0 %v396
        %576 = vmatprep.subr.bf16.mxu0 %v393
        %577 = vmatpush1.bf16.msra.mxu0 %v392
        %578 = vmatprep.subr.bf16.mxu0 %v389
        %579 = vmatpush1.bf16.msra.mxu0 %v388
        %580 = vmatprep.subr.bf16.mxu0 %v385
        %581 = vmatpush1.bf16.msra.mxu0 %v384
        %582 = vmatprep.subr.bf16.mxu0 %v381
        %583 = vmatpush1.bf16.msra.mxu0 %v380
        %584 = vmatprep.subr.bf16.mxu0 0
        %585 = vmatpush2.bf16.msra.mxu0 0
        %586 = vmatprep.subr.bf16.mxu0 0
        %587 = vmatpush2.bf16.msra.mxu0 0
        %588 = vmatprep.subr.bf16.mxu0 0
        %589 = vmatpush2.bf16.msra.mxu0 0
        %590 = vmatprep.subr.bf16.mxu0 0
        %591 = vmatpush2.bf16.msra.mxu0 0
        %592 = vmatprep.subr.bf16.mxu0 0
        %593 = vmatpush2.bf16.msra.mxu0 0
        %594 = vmatprep.subr.bf16.mxu0 0
        %595 = vmatpush2.bf16.msra.mxu0 0
        %596 = vmatprep.subr.bf16.mxu0 0
        %597 = vmatpush2.bf16.msra.mxu0 0
        %598 = vmatprep.subr.bf16.mxu0 0
        %599 = vmatpush2.bf16.msra.mxu0 0
        %600 = vmatprep.mubr.bf16.mxu0 0
        %601 = vmatmul.mubr.bf16.gmra.mxu0 %v567
        %v602 = vpop.f32.mrf.mxu0
        %v603 = vadd.f32 0.0, %v602
        %v604 = vpop.f32.mrf.mxu0
        %v605 = vadd.f32 0.0, %v604
        %v606 = vpop.f32.mrf.mxu0
        %v607 = vpop.f32.mrf.mxu0
        %608 = vdwg.mxu0
        %609 = vmatprep.subr.bf16.mxu0 %v411
        %610 = vmatpush1.bf16.msra.mxu0 %v410
        %611 = vmatprep.subr.bf16.mxu0 %v407
        %612 = vmatpush1.bf16.msra.mxu0 %v406
        %613 = vmatprep.subr.bf16.mxu0 %v403
        %614 = vmatpush1.bf16.msra.mxu0 %v402
        %615 = vmatprep.subr.bf16.mxu0 %v399
        %616 = vmatpush1.bf16.msra.mxu0 %v398
        %617 = vmatprep.subr.bf16.mxu0 %v395
        %618 = vmatpush1.bf16.msra.mxu0 %v394
        %619 = vmatprep.subr.bf16.mxu0 %v391
        %620 = vmatpush1.bf16.msra.mxu0 %v390
        %621 = vmatprep.subr.bf16.mxu0 %v387
        %622 = vmatpush1.bf16.msra.mxu0 %v386
        %623 = vmatprep.subr.bf16.mxu0 %v383
        %624 = vmatpush1.bf16.msra.mxu0 %v382
        %625 = vmatprep.subr.bf16.mxu0 0
        %626 = vmatpush2.bf16.msra.mxu0 0
        %627 = vmatprep.subr.bf16.mxu0 0
        %628 = vmatpush2.bf16.msra.mxu0 0
        %629 = vmatprep.subr.bf16.mxu0 0
        %630 = vmatpush2.bf16.msra.mxu0 0
        %631 = vmatprep.subr.bf16.mxu0 0
        %632 = vmatpush2.bf16.msra.mxu0 0
        %633 = vmatprep.subr.bf16.mxu0 0
        %634 = vmatpush2.bf16.msra.mxu0 0
        %635 = vmatprep.subr.bf16.mxu0 0
        %636 = vmatpush2.bf16.msra.mxu0 0
        %637 = vmatprep.subr.bf16.mxu0 0
        %638 = vmatpush2.bf16.msra.mxu0 0
        %639 = vmatprep.subr.bf16.mxu0 0
        %640 = vmatpush2.bf16.msra.mxu0 0
        %641 = vmatprep.mubr.bf16.mxu0 0
        %642 = vmatmul.mubr.bf16.gmra.mxu0 %v567
        %v643 = vpop.f32.mrf.mxu0
        %v644 = vadd.f32 0.0, %v643
        %v645 = vpop.f32.mrf.mxu0
        %v646 = vadd.f32 0.0, %v645
        %v647 = vpop.f32.mrf.mxu0
        %v648 = vpop.f32.mrf.mxu0
        %649 = vdwg.mxu0
        %v650 = vadd.f32 %v563, %v603
        %v651 = vadd.f32 %v564, %v605
        %v652 = vadd.f32 %v565, %v644
        %v653 = vadd.f32 %v566, %v646
        %v654 = vxor.u32 %v650, 2147483648
        %v655 = vmul.f32 %v654, 1.442695
        %v656 = vpow.pop %v655
        %v657 = vadd.f32 %v656, 1.0
        %v658 = vrcp.pop %v657
        %v659 = vmul.f32 1.0, %v658
        %v660 = vxor.u32 %v651, 2147483648
        %v661 = vmul.f32 %v660, 1.442695
        %v662 = vpow.pop %v661
        %v663 = vadd.f32 %v662, 1.0
        %v664 = vrcp.pop %v663
        %v665 = vmul.f32 1.0, %v664
        %v666 = vtanh.pop %v652
        %v667 = vxor.u32 %v653, 2147483648
        %v668 = vmul.f32 %v667, 1.442695
        %v669 = vpow.pop %v668
        %v670 = vadd.f32 %v669, 1.0
        %v671 = vrcp.pop %v670
        %v672 = vmul.f32 1.0, %v671
        %v673 = vmul.f32 %v665, %v559
        %v674 = vmul.f32 %v659, %v666
        %v675 = vadd.f32 %v673, %v674
        %v676 = vtanh.pop %v675
        %v677 = vmul.f32 %v672, %v676
        %s678 = sadd.s32 %s274, 1
        %p679 = scmp.lt.s32.totalorder %s678, 8
        %s680 = scalar_select %p679, 1, 0
        %v681 = vstv %s680
        %vm682 = vcmp.eq.s32.totalorder %v681, 1
        %v683 = vsel %vm682, %v677, %v558
        %v684 = vsel %vm682, %v675, %v559
        %s685 = scalar_lea.vmem %s206, 32 [#allocation4]
        %v686 = vld [vmem:[%s685] sm:$0xff]
        %v687 = vld [vmem:[%s685 + $0x8] sm:$0xff]
        %v688 = vunpack.c.l.bf16 %v686
        %v689 = vunpack.c.h.bf16 %v686
        %v690 = vunpack.c.l.bf16 %v687
        %v691 = vunpack.c.h.bf16 %v687
        %v692 = vpack.c.bf16 %v683, %v683
        %693 = vmatprep.subr.bf16.mxu0 %v409
        %694 = vmatpush1.bf16.msra.mxu0 %v408
        %695 = vmatprep.subr.bf16.mxu0 %v405
        %696 = vmatpush1.bf16.msra.mxu0 %v404
        %697 = vmatprep.subr.bf16.mxu0 %v401
        %698 = vmatpush1.bf16.msra.mxu0 %v400
        %699 = vmatprep.subr.bf16.mxu0 %v397
        %700 = vmatpush1.bf16.msra.mxu0 %v396
        %701 = vmatprep.subr.bf16.mxu0 %v393
        %702 = vmatpush1.bf16.msra.mxu0 %v392
        %703 = vmatprep.subr.bf16.mxu0 %v389
        %704 = vmatpush1.bf16.msra.mxu0 %v388
        %705 = vmatprep.subr.bf16.mxu0 %v385
        %706 = vmatpush1.bf16.msra.mxu0 %v384
        %707 = vmatprep.subr.bf16.mxu0 %v381
        %708 = vmatpush1.bf16.msra.mxu0 %v380
        %709 = vmatprep.subr.bf16.mxu0 0
        %710 = vmatpush2.bf16.msra.mxu0 0
        %711 = vmatprep.subr.bf16.mxu0 0
        %712 = vmatpush2.bf16.msra.mxu0 0
        %713 = vmatprep.subr.bf16.mxu0 0
        %714 = vmatpush2.bf16.msra.mxu0 0
        %715 = vmatprep.subr.bf16.mxu0 0
        %716 = vmatpush2.bf16.msra.mxu0 0
        %717 = vmatprep.subr.bf16.mxu0 0
        %718 = vmatpush2.bf16.msra.mxu0 0
        %719 = vmatprep.subr.bf16.mxu0 0
        %720 = vmatpush2.bf16.msra.mxu0 0
        %721 = vmatprep.subr.bf16.mxu0 0
        %722 = vmatpush2.bf16.msra.mxu0 0
        %723 = vmatprep.subr.bf16.mxu0 0
        %724 = vmatpush2.bf16.msra.mxu0 0
        %725 = vmatprep.mubr.bf16.mxu0 0
        %726 = vmatmul.mubr.bf16.gmra.mxu0 %v692
        %v727 = vpop.f32.mrf.mxu0
        %v728 = vadd.f32 0.0, %v727
        %v729 = vpop.f32.mrf.mxu0
        %v730 = vadd.f32 0.0, %v729
        %v731 = vpop.f32.mrf.mxu0
        %v732 = vpop.f32.mrf.mxu0
        %733 = vdwg.mxu0
        %734 = vmatprep.subr.bf16.mxu0 %v411
        %735 = vmatpush1.bf16.msra.mxu0 %v410
        %736 = vmatprep.subr.bf16.mxu0 %v407
        %737 = vmatpush1.bf16.msra.mxu0 %v406
        %738 = vmatprep.subr.bf16.mxu0 %v403
        %739 = vmatpush1.bf16.msra.mxu0 %v402
        %740 = vmatprep.subr.bf16.mxu0 %v399
        %741 = vmatpush1.bf16.msra.mxu0 %v398
        %742 = vmatprep.subr.bf16.mxu0 %v395
        %743 = vmatpush1.bf16.msra.mxu0 %v394
        %744 = vmatprep.subr.bf16.mxu0 %v391
        %745 = vmatpush1.bf16.msra.mxu0 %v390
        %746 = vmatprep.subr.bf16.mxu0 %v387
        %747 = vmatpush1.bf16.msra.mxu0 %v386
        %748 = vmatprep.subr.bf16.mxu0 %v383
        %749 = vmatpush1.bf16.msra.mxu0 %v382
        %750 = vmatprep.subr.bf16.mxu0 0
        %751 = vmatpush2.bf16.msra.mxu0 0
        %752 = vmatprep.subr.bf16.mxu0 0
        %753 = vmatpush2.bf16.msra.mxu0 0
        %754 = vmatprep.subr.bf16.mxu0 0
        %755 = vmatpush2.bf16.msra.mxu0 0
        %756 = vmatprep.subr.bf16.mxu0 0
        %757 = vmatpush2.bf16.msra.mxu0 0
        %758 = vmatprep.subr.bf16.mxu0 0
        %759 = vmatpush2.bf16.msra.mxu0 0
        %760 = vmatprep.subr.bf16.mxu0 0
        %761 = vmatpush2.bf16.msra.mxu0 0
        %762 = vmatprep.subr.bf16.mxu0 0
        %763 = vmatpush2.bf16.msra.mxu0 0
        %764 = vmatprep.subr.bf16.mxu0 0
        %765 = vmatpush2.bf16.msra.mxu0 0
        %766 = vmatprep.mubr.bf16.mxu0 0
        %767 = vmatmul.mubr.bf16.gmra.mxu0 %v692
        %v768 = vpop.f32.mrf.mxu0
        %v769 = vadd.f32 0.0, %v768
        %v770 = vpop.f32.mrf.mxu0
        %v771 = vadd.f32 0.0, %v770
        %v772 = vpop.f32.mrf.mxu0
        %v773 = vpop.f32.mrf.mxu0
        %774 = vdwg.mxu0
        %v775 = vadd.f32 %v688, %v728
        %v776 = vadd.f32 %v689, %v730
        %v777 = vadd.f32 %v690, %v769
        %v778 = vadd.f32 %v691, %v771
        %v779 = vxor.u32 %v775, 2147483648
        %v780 = vmul.f32 %v779, 1.442695
        %v781 = vpow.pop %v780
        %v782 = vadd.f32 %v781, 1.0
        %v783 = vrcp.pop %v782
        %v784 = vmul.f32 1.0, %v783
        %v785 = vxor.u32 %v776, 2147483648
        %v786 = vmul.f32 %v785, 1.442695
        %v787 = vpow.pop %v786
        %v788 = vadd.f32 %v787, 1.0
        %v789 = vrcp.pop %v788
        %v790 = vmul.f32 1.0, %v789
        %v791 = vtanh.pop %v777
        %v792 = vxor.u32 %v778, 2147483648
        %v793 = vmul.f32 %v792, 1.442695
        %v794 = vpow.pop %v793
        %v795 = vadd.f32 %v794, 1.0
        %v796 = vrcp.pop %v795
        %v797 = vmul.f32 1.0, %v796
        %v798 = vmul.f32 %v790, %v684
        %v799 = vmul.f32 %v784, %v791
        %v800 = vadd.f32 %v798, %v799
        %v801 = vtanh.pop %v800
        %v802 = vmul.f32 %v797, %v801
        %s803 = sadd.s32 %s274, 2
        %p804 = scmp.lt.s32.totalorder %s803, 8
        %s805 = scalar_select %p804, 1, 0
        %v806 = vstv %s805
        %vm807 = vcmp.eq.s32.totalorder %v806, 1
        %v808 = vsel %vm807, %v802, %v683
        %v809 = vsel %vm807, %v800, %v684
        %810 = vst [vmem:[#allocation2] sm:$0xff] %v808
        %811 = vst [vmem:[#allocation3] sm:$0xff] %v809
        %p812 = scmp.eq.s32.totalorder %s20, 2
        // Predicated region
        $region53: #{tpu_custom_call.1} parent=35 // pred_check
          %p813 = pneg %p812
        $region54: #{tpu_custom_call.1} parent=35 // pred_check_branch
          %815 = sbr.rel (%p813) target = $region56
        $region55: #{tpu_custom_call.1} parent=35 // pred_region
          %v816 = vld [vmem:[#allocation9] sm:$0xff]
          %v817 = vld [vmem:[#allocation9 + $0x8] sm:$0xff]
          %v818 = vld [vmem:[#allocation9 + $0x10] sm:$0xff]
          %v819 = vld [vmem:[#allocation9 + $0x18] sm:$0xff]
          %v820 = vld [vmem:[#allocation9 + $0x20] sm:$0xff]
          %v821 = vld [vmem:[#allocation9 + $0x28] sm:$0xff]
          %v822 = vld [vmem:[#allocation9 + $0x30] sm:$0xff]
          %v823 = vld [vmem:[#allocation9 + $0x38] sm:$0xff]
          %v824 = vld [vmem:[#allocation9 + $0x40] sm:$0xff]
          %v825 = vld [vmem:[#allocation9 + $0x48] sm:$0xff]
          %v826 = vld [vmem:[#allocation9 + $0x50] sm:$0xff]
          %v827 = vld [vmem:[#allocation9 + $0x58] sm:$0xff]
          %v828 = vld [vmem:[#allocation9 + $0x60] sm:$0xff]
          %v829 = vld [vmem:[#allocation9 + $0x68] sm:$0xff]
          %v830 = vld [vmem:[#allocation9 + $0x70] sm:$0xff]
          %v831 = vld [vmem:[#allocation9 + $0x78] sm:$0xff]
          %v832 = vld [vmem:[%s3] sm:$0x1]
          %v834 = vlaneseq
          %v835 = vshrl.u32 %v834, 7
          %v836 = vsub.s32 0, %v835
          %v837 = vrot.slane %v832, %v836
          %839 = vmatprep.subr.mxu0 0.0
          %840 = vmatpush1.msra.mxu0 %v831
          %841 = vmatprep.subr.mxu0 0.0
          %842 = vmatpush1.msra.mxu0 %v830
          %843 = vmatprep.subr.mxu0 0.0
          %844 = vmatpush1.msra.mxu0 %v829
          %845 = vmatprep.subr.mxu0 0.0
          %846 = vmatpush1.msra.mxu0 %v828
          %847 = vmatprep.subr.mxu0 0.0
          %848 = vmatpush1.msra.mxu0 %v827
          %849 = vmatprep.subr.mxu0 0.0
          %850 = vmatpush1.msra.mxu0 %v826
          %851 = vmatprep.subr.mxu0 0.0
          %852 = vmatpush1.msra.mxu0 %v825
          %853 = vmatprep.subr.mxu0 0.0
          %854 = vmatpush1.msra.mxu0 %v824
          %855 = vmatprep.subr.mxu0 0.0
          %856 = vmatpush1.msra.mxu0 %v823
          %857 = vmatprep.subr.mxu0 0.0
          %858 = vmatpush1.msra.mxu0 %v822
          %859 = vmatprep.subr.mxu0 0.0
          %860 = vmatpush1.msra.mxu0 %v821
          %861 = vmatprep.subr.mxu0 0.0
          %862 = vmatpush1.msra.mxu0 %v820
          %863 = vmatprep.subr.mxu0 0.0
          %864 = vmatpush1.msra.mxu0 %v819
          %865 = vmatprep.subr.mxu0 0.0
          %866 = vmatpush1.msra.mxu0 %v818
          %867 = vmatprep.subr.mxu0 0.0
          %868 = vmatpush1.msra.mxu0 %v817
          %869 = vmatprep.subr.mxu0 0.0
          %870 = vmatpush1.msra.mxu0 %v816
          %871 = vmatprep.subr.mxu0 0.0
          %872 = vmatpush2.msra.mxu0 0.0
          %873 = vmatprep.subr.mxu0 0.0
          %874 = vmatpush2.msra.mxu0 0.0
          %875 = vmatprep.subr.mxu0 0.0
          %876 = vmatpush2.msra.mxu0 0.0
          %877 = vmatprep.subr.mxu0 0.0
          %878 = vmatpush2.msra.mxu0 0.0
          %879 = vmatprep.subr.mxu0 0.0
          %880 = vmatpush2.msra.mxu0 0.0
          %881 = vmatprep.subr.mxu0 0.0
          %882 = vmatpush2.msra.mxu0 0.0
          %883 = vmatprep.subr.mxu0 0.0
          %884 = vmatpush2.msra.mxu0 0.0
          %885 = vmatprep.subr.mxu0 0.0
          %886 = vmatpush2.msra.mxu0 0.0
          %887 = vmatprep.subr.mxu0 0.0
          %888 = vmatpush2.msra.mxu0 0.0
          %889 = vmatprep.subr.mxu0 0.0
          %890 = vmatpush2.msra.mxu0 0.0
          %891 = vmatprep.subr.mxu0 0.0
          %892 = vmatpush2.msra.mxu0 0.0
          %893 = vmatprep.subr.mxu0 0.0
          %894 = vmatpush2.msra.mxu0 0.0
          %895 = vmatprep.subr.mxu0 0.0
          %896 = vmatpush2.msra.mxu0 0.0
          %897 = vmatprep.subr.mxu0 0.0
          %898 = vmatpush2.msra.mxu0 0.0
          %899 = vmatprep.subr.mxu0 0.0
          %900 = vmatpush2.msra.mxu0 0.0
          %901 = vmatprep.subr.mxu0 0.0
          %902 = vmatpush2.msra.mxu0 0.0
          %903 = vmatprep.mubr.f32.mxu0 0.0
          %904 = vmatmul.mubr.f32.gmra.mxu0 %v808
          %v905 = vpop.f32.mrf.mxu0
          %v906 = vadd.f32 %v837, %v905
          %v907 = vpop.f32.mrf.mxu0
          %908 = vdwg.mxu0
          %909 = vst [vmem:[#allocation10] sm:$0xff] %v906
        $region56: #{tpu_custom_call.1} parent=35 // pred_fallthru
          _
        // Predicated region
        $region57: #{tpu_custom_call.1} parent=35 // pred_check
          %p910 = pneg %p122
        $region58: #{tpu_custom_call.1} parent=35 // pred_check_branch
          %912 = sbr.rel (%p910) target = $region60
        $region59: #{tpu_custom_call.1} parent=35 // pred_region
          %s914 = ssub.s32 128, 128
          %915 = vsyncadd [#allocation6], %s914
          %s917 = sshll.u32 [#allocation10], 4
          %s918 = int_to_ptr.vmem [resolvable:$true] %s917
          %920 = dma.vmem_to_hbm [thread:$0]  %s918, 128, %s4, [#allocation6]
        $region60: #{tpu_custom_call.1} parent=35 // pred_fallthru
          _
        // Predicated region
        $region61: #{tpu_custom_call.1} parent=35 // pred_check
          %p921 = pneg %p122
        $region62: #{tpu_custom_call.1} parent=35 // pred_check_branch
          %923 = sbr.rel (%p921) target = $region64
        $region63: #{tpu_custom_call.1} parent=35 // pred_region
          %924 = dma.done [#allocation6], 128
        $region64: #{tpu_custom_call.1} parent=35 // pred_fallthru
          _
      $region36: #{tpu_custom_call.1} parent=5 // pred_fallthru
        _
      %p925 = scmp.le.s32.totalorder 2, %s15
      // Predicated region
      $region65: #{tpu_custom_call.1} parent=5 // pred_check
        %p926 = pneg %p925
      $region66: #{tpu_custom_call.1} parent=5 // pred_check_branch
        %928 = sbr.rel (%p926) target = $region68
      $region67: #{tpu_custom_call.1} parent=5 // pred_region
        %s929 = ssub.s32 %s15, 2
      $region68: #{tpu_custom_call.1} parent=5 // pred_fallthru
        _
    $region6: #{tpu_custom_call.1} parent=1 // loop_footer
      %s19 = sadd.s32 1, %s15
    $region7: #{tpu_custom_call.1} parent=1 // loop_footer_branch
      %14 = sbr.rel target = $region3
    $region8: #{tpu_custom_call.1} parent=1 // loop_exit
      _
    %930 = vsyncpa [#allocation5], 1
    %s931 = scalar_lea.sflag [#allocation5], 1
    %932 = vsyncpa %s931, 1
    %933 = vsyncpa [#allocation8], 1
    %934 = vsyncpa [#allocation6], 1
    %s935 = scalar_lea.sflag [#allocation6], 1
    %936 = vsyncpa %s935, 1

</llo_original>
